<compile_context>
chip_gen: v7x
topology: tpu7x:2x2x1
jax: 0.10.0
libtpu: 0.0.40
codegen_flags: <defaults>
</compile_context>

<pallas_src>
import jax
import jax.numpy as jnp
from jax.experimental import pallas as pl
from jax.experimental.pallas import tpu as pltpu

FACTOR_NUM = 32   # scaled-down "factor_num"
USER_NUM = 48     # scaled-down "user_num"
ITEM_NUM = 64     # scaled-down "item_num"
BATCH = 8
OUT_LANES = 128   # lane-dense packed output width


# ----------------------------------------------------------------------------
# Fused kernel: GCN propagation + scalar-indexed gather + BPR preds / losses
# ----------------------------------------------------------------------------
def _bpr_fused_kernel(u_idx_ref, i_idx_ref, j_idx_ref,       # SMEM (B,) int32
                      ui_all_ref, iu_all_ref,                 # VMEM bf16 (2U,I),(2I,U)
                      uemb_ref, iemb_ref, ujs_ref,            # VMEM f32 params
                      out_ref,                                # VMEM (B,128) f32
                      gcn_u_ref, gcn_i_ref, gat_ref):         # VMEM scratch
    B = gat_ref.shape[0] // 3
    U, F = uemb_ref.shape
    I = iemb_ref.shape[0]

    ue = uemb_ref[...]                           # (U, F) f32
    ie = iemb_ref[...]                           # (I, F) f32
    ue_b = ue.astype(jnp.bfloat16)               # matmul operands in bf16
    ie_b = ie.astype(jnp.bfloat16)
    ui_all = ui_all_ref[...]                     # (2U, I) bf16: [ui; ui3]
    iu_all = iu_all_ref[...]                     # (2I, U) bf16: [iu; iu3]

    # ---- propagation: hop1 + hop3 share an RHS -> 2 stacked dots, then hop2 ----
    g13u = jnp.dot(ui_all, ie_b, preferred_element_type=jnp.float32)   # (2U, F)
    g13i = jnp.dot(iu_all, ue_b, preferred_element_type=jnp.float32)   # (2I, F)
    g1u, g3u = g13u[:U], g13u[U:]
    g1i, g3i = g13i[:I], g13i[I:]

    g2u = jnp.dot(ui_all[:U], g1i.astype(jnp.bfloat16),
                  preferred_element_type=jnp.float32)                  # (U, F)
    g2i = jnp.dot(iu_all[:I], g1u.astype(jnp.bfloat16),
                  preferred_element_type=jnp.float32)                  # (I, F)

    # factored 0.25 combine in f32 (self term uses the un-rounded f32 embeddings)
    gcn_u_ref[...] = 0.25 * (ue + g1u + g2u) + g3u * ujs_ref[...]      # (U, F)
    gcn_i_ref[...] = 0.25 * (ie + g1i + g2i + g3i)                     # (I, F)

    # ---- gather: B dynamic sublane row reads driven by SMEM scalar indices ----
    # TODO(synk): out-of-range indices read wrong rows silently (no gather bounds
    # check on TPU); a pl.debug_check could guard this under debug mode.
    for b in range(B):                           # tiny static unroll (3B row copies)
        gat_ref[pl.ds(b, 1), :]         = gcn_u_ref[pl.ds(u_idx_ref[b], 1), :]
        gat_ref[pl.ds(B + b, 1), :]     = gcn_i_ref[pl.ds(i_idx_ref[b], 1), :]
        gat_ref[pl.ds(2 * B + b, 1), :] = gcn_i_ref[pl.ds(j_idx_ref[b], 1), :]
    g = gat_ref[...]                             # (3B, F)
    u, it_i, it_j = g[:B], g[B:2 * B], g[2 * B:]

    # ---- predictions + losses ----
    pred_i = jnp.sum(u * it_i, axis=-1, keepdims=True)                 # (B, 1)
    pred_j = jnp.sum(u * it_j, axis=-1, keepdims=True)                 # (B, 1)
    l2 = 1e-4 * jnp.sum(u * u + it_i * it_i + it_j * it_j,
                        axis=-1, keepdims=True)                        # (B, 1)

    x = pred_i - pred_j
    # numerically-stable log(sigmoid(x)) = min(x, 0) - log(1 + exp(-|x|))
    log_sig = jnp.minimum(x, 0.0) - jnp.log(1.0 + jnp.exp(-jnp.abs(x)))
    loss2 = -jnp.sum(log_sig) * (1.0 / B)
    loss = loss2 + jnp.sum(l2) * (1.0 / B)

    # ---- pack into one lane-dense output: lanes 0..3 = pred_i, pred_j, loss, loss2
    lane = jax.lax.broadcasted_iota(jnp.int32, out_ref.shape, 1)
    packed = jnp.where(lane == 0, pred_i, 0.0)
    packed = jnp.where(lane == 1, pred_j, packed)
    packed = jnp.where(lane == 2, loss, packed)
    packed = jnp.where(lane == 3, loss2, packed)
    out_ref[...] = packed


def _bpr_forward_impl(user, item_i, item_j, user_item_3, item_user_3, user_js,
                      user_item_matrix, item_user_matrix, user_emb, item_emb):
    U, F = user_emb.shape
    I = item_emb.shape[0]
    B = user.shape[0]

    # Stack shared-RHS adjacency pairs in the wrapper (not in-kernel) and store
    # them in bf16 (the streamed, bandwidth-dominant operand at real sizes).
    ui_all = jnp.concatenate([user_item_matrix, user_item_3],
                             axis=0).astype(jnp.bfloat16)   # (2U, I)
    iu_all = jnp.concatenate([item_user_matrix, item_user_3],
                             axis=0).astype(jnp.bfloat16)   # (2I, U)

    full = lambda shape: pl.BlockSpec(shape, lambda i: (0,) * len(shape))
    smem = pl.BlockSpec(memory_space=pltpu.MemorySpace.SMEM)

    packed = pl.pallas_call(
        _bpr_fused_kernel,
        out_shape=jax.ShapeDtypeStruct((B, OUT_LANES), jnp.float32),
        grid=(1,),
        in_specs=[smem, smem, smem,
                  full((2 * U, I)), full((2 * I, U)),
                  full((U, F)), full((I, F)), full((U, 1))],
        out_specs=full((B, OUT_LANES)),
        scratch_shapes=[pltpu.VMEM((U, F), jnp.float32),       # gcn_users
                        pltpu.VMEM((I, F), jnp.float32),       # gcn_items
                        pltpu.VMEM((3 * B, F), jnp.float32)],  # gathered rows
        compiler_params=pltpu.CompilerParams(
            dimension_semantics=("arbitrary",)),
    )(user, item_i, item_j, ui_all, iu_all, user_emb, item_emb, user_js)

    pred_i = packed[:, 0]
    pred_j = packed[:, 1]
    loss = packed[0, 2]
    loss2 = packed[0, 3]
    return pred_i, pred_j, loss, loss2


@jax.jit
def bpr_forward(user, item_i, item_j, user_item_3, item_user_3, user_js,
                user_item_matrix, item_user_matrix, user_emb, item_emb):
    return _bpr_forward_impl(user, item_i, item_j, user_item_3, item_user_3,
                             user_js, user_item_matrix, item_user_matrix,
                             user_emb, item_emb)


# Pure-JAX reference mirroring the PyTorch forward at the kernel's precision
# (bf16 MXU operands, f32 accumulation / elementwise math).
def bpr_forward_ref(user, item_i, item_j, ui3, iu3, user_js, ui, iu, ue, ie):
    bf = lambda a: a.astype(jnp.bfloat16).astype(jnp.float32)
    ui_b, ui3_b = bf(ui), bf(ui3)
    iu_b, iu3_b = bf(iu), bf(iu3)
    ue_b, ie_b = bf(ue), bf(ie)
    g1u = ui_b @ ie_b
    g1i = iu_b @ ue_b
    g2u = ui_b @ bf(g1i)
    g2i = iu_b @ bf(g1u)
    g3u = ui3_b @ ie_b
    g3i = iu3_b @ ue_b
    gcn_u = 0.25 * ue + 0.25 * g1u + 0.25 * g2u + g3u * user_js
    gcn_i = 0.25 * ie + 0.25 * g1i + 0.25 * g2i + 0.25 * g3i
    u = gcn_u[user]
    it_i = gcn_i[item_i]
    it_j = gcn_i[item_j]
    pred_i = (u * it_i).sum(-1)
    pred_j = (u * it_j).sum(-1)
    l2 = 1e-4 * (u ** 2 + it_i ** 2 + it_j ** 2).sum(-1)
    loss2 = -jnp.mean(jnp.log(jax.nn.sigmoid(pred_i - pred_j)))
    loss = loss2 + jnp.mean(l2)
    return pred_i, pred_j, loss, loss2


def _make_norm_adj(key, rows, cols):
    # random binary adjacency, row-normalized (like a normalized interaction matrix)
    a = (jax.random.uniform(key, (rows, cols)) > 0.7).astype(jnp.float32)
    return a / (a.sum(axis=1, keepdims=True) + 1e-8)


if __name__ == "__main__":
    key = jax.random.PRNGKey(0)
    ks = jax.random.split(key, 10)

    # Parameters (nn.Embedding weights, std=0.01)
    user_emb = 0.01 * jax.random.normal(ks[0], (USER_NUM, FACTOR_NUM), jnp.float32)
    item_emb = 0.01 * jax.random.normal(ks[1], (ITEM_NUM, FACTOR_NUM), jnp.float32)

    # Dense stand-ins for the sparse propagation matrices
    user_item_matrix = _make_norm_adj(ks[2], USER_NUM, ITEM_NUM)
    item_user_matrix = _make_norm_adj(ks[3], ITEM_NUM, USER_NUM)
    user_item_3 = _make_norm_adj(ks[4], USER_NUM, ITEM_NUM)
    item_user_3 = _make_norm_adj(ks[5], ITEM_NUM, USER_NUM)
    user_js = 0.25 * jax.random.uniform(ks[6], (USER_NUM, 1), jnp.float32)

    # Batch of (user, positive item, negative item) triples
    user = jax.random.randint(ks[7], (BATCH,), 0, USER_NUM, jnp.int32)
    item_i = jax.random.randint(ks[8], (BATCH,), 0, ITEM_NUM, jnp.int32)
    item_j = jax.random.randint(ks[9], (BATCH,), 0, ITEM_NUM, jnp.int32)

    pred_i, pred_j, loss, loss2 = jax.block_until_ready(
        bpr_forward(user, item_i, item_j, user_item_3, item_user_3, user_js,
                    user_item_matrix, item_user_matrix, user_emb, item_emb))

    # sanity check against the precision-mirrored pure-JAX reference
    r_pi, r_pj, r_loss, r_loss2 = bpr_forward_ref(
        user, item_i, item_j, user_item_3, item_user_3, user_js,
        user_item_matrix, item_user_matrix, user_emb, item_emb)
    assert jnp.allclose(pred_i, r_pi, atol=1e-5, rtol=1e-4)
    assert jnp.allclose(pred_j, r_pj, atol=1e-5, rtol=1e-4)
    assert jnp.allclose(loss, r_loss, atol=1e-5, rtol=1e-4)
    assert jnp.allclose(loss2, r_loss2, atol=1e-5, rtol=1e-4)

    print("KERNEL_OK")
</pallas_src>

<mosaic_0001>
module attributes {stable_mosaic.version = 11 : i64} {
  func.func @_bpr_fused_kernel(%arg0: i32, %arg1: memref<8xi32, #tpu.memory_space<smem>>, %arg2: memref<8xi32, #tpu.memory_space<smem>>, %arg3: memref<8xi32, #tpu.memory_space<smem>>, %arg4: memref<96x64xbf16, #tpu.memory_space<vmem>>, %arg5: memref<128x48xbf16, #tpu.memory_space<vmem>>, %arg6: memref<48x32xf32, #tpu.memory_space<vmem>>, %arg7: memref<64x32xf32, #tpu.memory_space<vmem>>, %arg8: memref<48x1xf32, #tpu.memory_space<vmem>>, %arg9: memref<8x128xf32, #tpu.memory_space<vmem>>, %arg10: memref<48x32xf32, #tpu.memory_space<vmem>>, %arg11: memref<64x32xf32, #tpu.memory_space<vmem>>, %arg12: memref<24x32xf32, #tpu.memory_space<vmem>>) attributes {dimension_semantics = [#tpu.dimension_semantics<arbitrary>], iteration_bounds = array<i64: 1>, scalar_prefetch = 0 : i64, scratch_operands = 3 : i64, tpu.core_type = #tpu.core_type<tc>, window_params = [{transform_indices = @transform_0, window_bounds = array<i64: 8>}, {transform_indices = @transform_1, window_bounds = array<i64: 8>}, {transform_indices = @transform_2, window_bounds = array<i64: 8>}, {pipeline_mode = #tpu.pipeline_mode<synchronous>, transform_indices = @transform_3, window_bounds = array<i64: 96, 64>}, {pipeline_mode = #tpu.pipeline_mode<synchronous>, transform_indices = @transform_4, window_bounds = array<i64: 128, 48>}, {pipeline_mode = #tpu.pipeline_mode<synchronous>, transform_indices = @transform_5, window_bounds = array<i64: 48, 32>}, {pipeline_mode = #tpu.pipeline_mode<synchronous>, transform_indices = @transform_6, window_bounds = array<i64: 64, 32>}, {pipeline_mode = #tpu.pipeline_mode<synchronous>, transform_indices = @transform_7, window_bounds = array<i64: 48, 1>}, {pipeline_mode = #tpu.pipeline_mode<synchronous>, transform_indices = @transform_8, window_bounds = array<i64: 8, 128>}]} {
    %c0 = arith.constant 0 : index
    %c0_0 = arith.constant 0 : index
    %0 = vector.load %arg6[%c0, %c0_0] : memref<48x32xf32, #tpu.memory_space<vmem>>, vector<48x32xf32>
    %c0_1 = arith.constant 0 : index
    %c0_2 = arith.constant 0 : index
    %1 = vector.load %arg7[%c0_1, %c0_2] : memref<64x32xf32, #tpu.memory_space<vmem>>, vector<64x32xf32>
    %2 = arith.truncf %0 : vector<48x32xf32> to vector<48x32xbf16>
    %3 = arith.truncf %1 : vector<64x32xf32> to vector<64x32xbf16>
    %c0_3 = arith.constant 0 : index
    %c0_4 = arith.constant 0 : index
    %4 = vector.load %arg4[%c0_3, %c0_4] : memref<96x64xbf16, #tpu.memory_space<vmem>>, vector<96x64xbf16>
    %c0_5 = arith.constant 0 : index
    %c0_6 = arith.constant 0 : index
    %5 = vector.load %arg5[%c0_5, %c0_6] : memref<128x48xbf16, #tpu.memory_space<vmem>>, vector<128x48xbf16>
    %cst = arith.constant dense<0.000000e+00> : vector<96x32xf32>
    %6 = tpu.matmul %4, %3, %cst {dimension_numbers = #tpu.dot_dimension_numbers<[1], [0], [0], [1], [0, 0, 1, 1], [], []>} : vector<96x64xbf16>, vector<64x32xbf16>, vector<96x32xf32> -> vector<96x32xf32>
    %cst_7 = arith.constant dense<0.000000e+00> : vector<128x32xf32>
    %7 = tpu.matmul %5, %2, %cst_7 {dimension_numbers = #tpu.dot_dimension_numbers<[1], [0], [0], [1], [0, 0, 1, 1], [], []>} : vector<128x48xbf16>, vector<48x32xbf16>, vector<128x32xf32> -> vector<128x32xf32>
    %8 = vector.extract_strided_slice %6 {offsets = [0, 0], sizes = [48, 32], strides = [1, 1]} : vector<96x32xf32> to vector<48x32xf32>
    %9 = vector.extract_strided_slice %6 {offsets = [48, 0], sizes = [48, 32], strides = [1, 1]} : vector<96x32xf32> to vector<48x32xf32>
    %10 = vector.extract_strided_slice %7 {offsets = [0, 0], sizes = [64, 32], strides = [1, 1]} : vector<128x32xf32> to vector<64x32xf32>
    %11 = vector.extract_strided_slice %7 {offsets = [64, 0], sizes = [64, 32], strides = [1, 1]} : vector<128x32xf32> to vector<64x32xf32>
    %12 = vector.extract_strided_slice %4 {offsets = [0, 0], sizes = [48, 64], strides = [1, 1]} : vector<96x64xbf16> to vector<48x64xbf16>
    %13 = arith.truncf %10 : vector<64x32xf32> to vector<64x32xbf16>
    %cst_8 = arith.constant dense<0.000000e+00> : vector<48x32xf32>
    %14 = tpu.matmul %12, %13, %cst_8 {dimension_numbers = #tpu.dot_dimension_numbers<[1], [0], [0], [1], [0, 0, 1, 1], [], []>} : vector<48x64xbf16>, vector<64x32xbf16>, vector<48x32xf32> -> vector<48x32xf32>
    %15 = vector.extract_strided_slice %5 {offsets = [0, 0], sizes = [64, 48], strides = [1, 1]} : vector<128x48xbf16> to vector<64x48xbf16>
    %16 = arith.truncf %8 : vector<48x32xf32> to vector<48x32xbf16>
    %cst_9 = arith.constant dense<0.000000e+00> : vector<64x32xf32>
    %17 = tpu.matmul %15, %16, %cst_9 {dimension_numbers = #tpu.dot_dimension_numbers<[1], [0], [0], [1], [0, 0, 1, 1], [], []>} : vector<64x48xbf16>, vector<48x32xbf16>, vector<64x32xf32> -> vector<64x32xf32>
    %18 = arith.addf %0, %8 : vector<48x32xf32>
    %19 = arith.addf %18, %14 : vector<48x32xf32>
    %cst_10 = arith.constant 2.500000e-01 : f32
    %20 = vector.broadcast %cst_10 : f32 to vector<48x32xf32>
    %21 = arith.mulf %20, %19 : vector<48x32xf32>
    %c0_11 = arith.constant 0 : index
    %c0_12 = arith.constant 0 : index
    %22 = vector.load %arg8[%c0_11, %c0_12] : memref<48x1xf32, #tpu.memory_space<vmem>>, vector<48x1xf32>
    %23 = vector.broadcast %22 : vector<48x1xf32> to vector<48x32xf32>
    %24 = arith.mulf %9, %23 : vector<48x32xf32>
    %25 = arith.addf %21, %24 : vector<48x32xf32>
    %c0_13 = arith.constant 0 : index
    %c0_14 = arith.constant 0 : index
    %26 = vector.load %arg10[%c0_13, %c0_14] : memref<48x32xf32, #tpu.memory_space<vmem>>, vector<48x32xf32>
    tpu.vector_store %arg10[%c0_13, %c0_14], %25 {strides = array<i32>} : memref<48x32xf32, #tpu.memory_space<vmem>>, vector<48x32xf32>,
    %27 = arith.addf %1, %10 : vector<64x32xf32>
    %28 = arith.addf %27, %17 : vector<64x32xf32>
    %29 = arith.addf %28, %11 : vector<64x32xf32>
    %cst_15 = arith.constant 2.500000e-01 : f32
    %30 = vector.broadcast %cst_15 : f32 to vector<64x32xf32>
    %31 = arith.mulf %30, %29 : vector<64x32xf32>
    %c0_16 = arith.constant 0 : index
    %c0_17 = arith.constant 0 : index
    %32 = vector.load %arg11[%c0_16, %c0_17] : memref<64x32xf32, #tpu.memory_space<vmem>>, vector<64x32xf32>
    tpu.vector_store %arg11[%c0_16, %c0_17], %31 {strides = array<i32>} : memref<64x32xf32, #tpu.memory_space<vmem>>, vector<64x32xf32>,
    %c0_18 = arith.constant 0 : index
    %33 = memref.load %arg1[%c0_18] : memref<8xi32, #tpu.memory_space<smem>>
    %34 = arith.index_cast %33 : i32 to index
    %c0_19 = arith.constant 0 : index
    %35 = vector.load %arg10[%34, %c0_19] : memref<48x32xf32, #tpu.memory_space<vmem>>, vector<1x32xf32>
    %c0_20 = arith.constant 0 : index
    %c0_21 = arith.constant 0 : index
    %36 = vector.load %arg12[%c0_20, %c0_21] : memref<24x32xf32, #tpu.memory_space<vmem>>, vector<1x32xf32>
    tpu.vector_store %arg12[%c0_20, %c0_21], %35 {strides = array<i32>} : memref<24x32xf32, #tpu.memory_space<vmem>>, vector<1x32xf32>,
    %c0_22 = arith.constant 0 : index
    %37 = memref.load %arg2[%c0_22] : memref<8xi32, #tpu.memory_space<smem>>
    %38 = arith.index_cast %37 : i32 to index
    %c0_23 = arith.constant 0 : index
    %39 = vector.load %arg11[%38, %c0_23] : memref<64x32xf32, #tpu.memory_space<vmem>>, vector<1x32xf32>
    %c8 = arith.constant 8 : index
    %c0_24 = arith.constant 0 : index
    %40 = vector.load %arg12[%c8, %c0_24] : memref<24x32xf32, #tpu.memory_space<vmem>>, vector<1x32xf32>
    tpu.vector_store %arg12[%c8, %c0_24], %39 {strides = array<i32>} : memref<24x32xf32, #tpu.memory_space<vmem>>, vector<1x32xf32>,
    %c0_25 = arith.constant 0 : index
    %41 = memref.load %arg3[%c0_25] : memref<8xi32, #tpu.memory_space<smem>>
    %42 = arith.index_cast %41 : i32 to index
    %c0_26 = arith.constant 0 : index
    %43 = vector.load %arg11[%42, %c0_26] : memref<64x32xf32, #tpu.memory_space<vmem>>, vector<1x32xf32>
    %c16 = arith.constant 16 : index
    %c0_27 = arith.constant 0 : index
    %44 = vector.load %arg12[%c16, %c0_27] : memref<24x32xf32, #tpu.memory_space<vmem>>, vector<1x32xf32>
    tpu.vector_store %arg12[%c16, %c0_27], %43 {strides = array<i32>} : memref<24x32xf32, #tpu.memory_space<vmem>>, vector<1x32xf32>,
    %c1 = arith.constant 1 : index
    %45 = memref.load %arg1[%c1] : memref<8xi32, #tpu.memory_space<smem>>
    %46 = arith.index_cast %45 : i32 to index
    %c0_28 = arith.constant 0 : index
    %47 = vector.load %arg10[%46, %c0_28] : memref<48x32xf32, #tpu.memory_space<vmem>>, vector<1x32xf32>
    %c1_29 = arith.constant 1 : index
    %c0_30 = arith.constant 0 : index
    %48 = vector.load %arg12[%c1_29, %c0_30] : memref<24x32xf32, #tpu.memory_space<vmem>>, vector<1x32xf32>
    tpu.vector_store %arg12[%c1_29, %c0_30], %47 {strides = array<i32>} : memref<24x32xf32, #tpu.memory_space<vmem>>, vector<1x32xf32>,
    %c1_31 = arith.constant 1 : index
    %49 = memref.load %arg2[%c1_31] : memref<8xi32, #tpu.memory_space<smem>>
    %50 = arith.index_cast %49 : i32 to index
    %c0_32 = arith.constant 0 : index
    %51 = vector.load %arg11[%50, %c0_32] : memref<64x32xf32, #tpu.memory_space<vmem>>, vector<1x32xf32>
    %c9 = arith.constant 9 : index
    %c0_33 = arith.constant 0 : index
    %52 = vector.load %arg12[%c9, %c0_33] : memref<24x32xf32, #tpu.memory_space<vmem>>, vector<1x32xf32>
    tpu.vector_store %arg12[%c9, %c0_33], %51 {strides = array<i32>} : memref<24x32xf32, #tpu.memory_space<vmem>>, vector<1x32xf32>,
    %c1_34 = arith.constant 1 : index
    %53 = memref.load %arg3[%c1_34] : memref<8xi32, #tpu.memory_space<smem>>
    %54 = arith.index_cast %53 : i32 to index
    %c0_35 = arith.constant 0 : index
    %55 = vector.load %arg11[%54, %c0_35] : memref<64x32xf32, #tpu.memory_space<vmem>>, vector<1x32xf32>
    %c17 = arith.constant 17 : index
    %c0_36 = arith.constant 0 : index
    %56 = vector.load %arg12[%c17, %c0_36] : memref<24x32xf32, #tpu.memory_space<vmem>>, vector<1x32xf32>
    tpu.vector_store %arg12[%c17, %c0_36], %55 {strides = array<i32>} : memref<24x32xf32, #tpu.memory_space<vmem>>, vector<1x32xf32>,
    %c2 = arith.constant 2 : index
    %57 = memref.load %arg1[%c2] : memref<8xi32, #tpu.memory_space<smem>>
    %58 = arith.index_cast %57 : i32 to index
    %c0_37 = arith.constant 0 : index
    %59 = vector.load %arg10[%58, %c0_37] : memref<48x32xf32, #tpu.memory_space<vmem>>, vector<1x32xf32>
    %c2_38 = arith.constant 2 : index
    %c0_39 = arith.constant 0 : index
    %60 = vector.load %arg12[%c2_38, %c0_39] : memref<24x32xf32, #tpu.memory_space<vmem>>, vector<1x32xf32>
    tpu.vector_store %arg12[%c2_38, %c0_39], %59 {strides = array<i32>} : memref<24x32xf32, #tpu.memory_space<vmem>>, vector<1x32xf32>,
    %c2_40 = arith.constant 2 : index
    %61 = memref.load %arg2[%c2_40] : memref<8xi32, #tpu.memory_space<smem>>
    %62 = arith.index_cast %61 : i32 to index
    %c0_41 = arith.constant 0 : index
    %63 = vector.load %arg11[%62, %c0_41] : memref<64x32xf32, #tpu.memory_space<vmem>>, vector<1x32xf32>
    %c10 = arith.constant 10 : index
    %c0_42 = arith.constant 0 : index
    %64 = vector.load %arg12[%c10, %c0_42] : memref<24x32xf32, #tpu.memory_space<vmem>>, vector<1x32xf32>
    tpu.vector_store %arg12[%c10, %c0_42], %63 {strides = array<i32>} : memref<24x32xf32, #tpu.memory_space<vmem>>, vector<1x32xf32>,
    %c2_43 = arith.constant 2 : index
    %65 = memref.load %arg3[%c2_43] : memref<8xi32, #tpu.memory_space<smem>>
    %66 = arith.index_cast %65 : i32 to index
    %c0_44 = arith.constant 0 : index
    %67 = vector.load %arg11[%66, %c0_44] : memref<64x32xf32, #tpu.memory_space<vmem>>, vector<1x32xf32>
    %c18 = arith.constant 18 : index
    %c0_45 = arith.constant 0 : index
    %68 = vector.load %arg12[%c18, %c0_45] : memref<24x32xf32, #tpu.memory_space<vmem>>, vector<1x32xf32>
    tpu.vector_store %arg12[%c18, %c0_45], %67 {strides = array<i32>} : memref<24x32xf32, #tpu.memory_space<vmem>>, vector<1x32xf32>,
    %c3 = arith.constant 3 : index
    %69 = memref.load %arg1[%c3] : memref<8xi32, #tpu.memory_space<smem>>
    %70 = arith.index_cast %69 : i32 to index
    %c0_46 = arith.constant 0 : index
    %71 = vector.load %arg10[%70, %c0_46] : memref<48x32xf32, #tpu.memory_space<vmem>>, vector<1x32xf32>
    %c3_47 = arith.constant 3 : index
    %c0_48 = arith.constant 0 : index
    %72 = vector.load %arg12[%c3_47, %c0_48] : memref<24x32xf32, #tpu.memory_space<vmem>>, vector<1x32xf32>
    tpu.vector_store %arg12[%c3_47, %c0_48], %71 {strides = array<i32>} : memref<24x32xf32, #tpu.memory_space<vmem>>, vector<1x32xf32>,
    %c3_49 = arith.constant 3 : index
    %73 = memref.load %arg2[%c3_49] : memref<8xi32, #tpu.memory_space<smem>>
    %74 = arith.index_cast %73 : i32 to index
    %c0_50 = arith.constant 0 : index
    %75 = vector.load %arg11[%74, %c0_50] : memref<64x32xf32, #tpu.memory_space<vmem>>, vector<1x32xf32>
    %c11 = arith.constant 11 : index
    %c0_51 = arith.constant 0 : index
    %76 = vector.load %arg12[%c11, %c0_51] : memref<24x32xf32, #tpu.memory_space<vmem>>, vector<1x32xf32>
    tpu.vector_store %arg12[%c11, %c0_51], %75 {strides = array<i32>} : memref<24x32xf32, #tpu.memory_space<vmem>>, vector<1x32xf32>,
    %c3_52 = arith.constant 3 : index
    %77 = memref.load %arg3[%c3_52] : memref<8xi32, #tpu.memory_space<smem>>
    %78 = arith.index_cast %77 : i32 to index
    %c0_53 = arith.constant 0 : index
    %79 = vector.load %arg11[%78, %c0_53] : memref<64x32xf32, #tpu.memory_space<vmem>>, vector<1x32xf32>
    %c19 = arith.constant 19 : index
    %c0_54 = arith.constant 0 : index
    %80 = vector.load %arg12[%c19, %c0_54] : memref<24x32xf32, #tpu.memory_space<vmem>>, vector<1x32xf32>
    tpu.vector_store %arg12[%c19, %c0_54], %79 {strides = array<i32>} : memref<24x32xf32, #tpu.memory_space<vmem>>, vector<1x32xf32>,
    %c4 = arith.constant 4 : index
    %81 = memref.load %arg1[%c4] : memref<8xi32, #tpu.memory_space<smem>>
    %82 = arith.index_cast %81 : i32 to index
    %c0_55 = arith.constant 0 : index
    %83 = vector.load %arg10[%82, %c0_55] : memref<48x32xf32, #tpu.memory_space<vmem>>, vector<1x32xf32>
    %c4_56 = arith.constant 4 : index
    %c0_57 = arith.constant 0 : index
    %84 = vector.load %arg12[%c4_56, %c0_57] : memref<24x32xf32, #tpu.memory_space<vmem>>, vector<1x32xf32>
    tpu.vector_store %arg12[%c4_56, %c0_57], %83 {strides = array<i32>} : memref<24x32xf32, #tpu.memory_space<vmem>>, vector<1x32xf32>,
    %c4_58 = arith.constant 4 : index
    %85 = memref.load %arg2[%c4_58] : memref<8xi32, #tpu.memory_space<smem>>
    %86 = arith.index_cast %85 : i32 to index
    %c0_59 = arith.constant 0 : index
    %87 = vector.load %arg11[%86, %c0_59] : memref<64x32xf32, #tpu.memory_space<vmem>>, vector<1x32xf32>
    %c12 = arith.constant 12 : index
    %c0_60 = arith.constant 0 : index
    %88 = vector.load %arg12[%c12, %c0_60] : memref<24x32xf32, #tpu.memory_space<vmem>>, vector<1x32xf32>
    tpu.vector_store %arg12[%c12, %c0_60], %87 {strides = array<i32>} : memref<24x32xf32, #tpu.memory_space<vmem>>, vector<1x32xf32>,
    %c4_61 = arith.constant 4 : index
    %89 = memref.load %arg3[%c4_61] : memref<8xi32, #tpu.memory_space<smem>>
    %90 = arith.index_cast %89 : i32 to index
    %c0_62 = arith.constant 0 : index
    %91 = vector.load %arg11[%90, %c0_62] : memref<64x32xf32, #tpu.memory_space<vmem>>, vector<1x32xf32>
    %c20 = arith.constant 20 : index
    %c0_63 = arith.constant 0 : index
    %92 = vector.load %arg12[%c20, %c0_63] : memref<24x32xf32, #tpu.memory_space<vmem>>, vector<1x32xf32>
    tpu.vector_store %arg12[%c20, %c0_63], %91 {strides = array<i32>} : memref<24x32xf32, #tpu.memory_space<vmem>>, vector<1x32xf32>,
    %c5 = arith.constant 5 : index
    %93 = memref.load %arg1[%c5] : memref<8xi32, #tpu.memory_space<smem>>
    %94 = arith.index_cast %93 : i32 to index
    %c0_64 = arith.constant 0 : index
    %95 = vector.load %arg10[%94, %c0_64] : memref<48x32xf32, #tpu.memory_space<vmem>>, vector<1x32xf32>
    %c5_65 = arith.constant 5 : index
    %c0_66 = arith.constant 0 : index
    %96 = vector.load %arg12[%c5_65, %c0_66] : memref<24x32xf32, #tpu.memory_space<vmem>>, vector<1x32xf32>
    tpu.vector_store %arg12[%c5_65, %c0_66], %95 {strides = array<i32>} : memref<24x32xf32, #tpu.memory_space<vmem>>, vector<1x32xf32>,
    %c5_67 = arith.constant 5 : index
    %97 = memref.load %arg2[%c5_67] : memref<8xi32, #tpu.memory_space<smem>>
    %98 = arith.index_cast %97 : i32 to index
    %c0_68 = arith.constant 0 : index
    %99 = vector.load %arg11[%98, %c0_68] : memref<64x32xf32, #tpu.memory_space<vmem>>, vector<1x32xf32>
    %c13 = arith.constant 13 : index
    %c0_69 = arith.constant 0 : index
    %100 = vector.load %arg12[%c13, %c0_69] : memref<24x32xf32, #tpu.memory_space<vmem>>, vector<1x32xf32>
    tpu.vector_store %arg12[%c13, %c0_69], %99 {strides = array<i32>} : memref<24x32xf32, #tpu.memory_space<vmem>>, vector<1x32xf32>,
    %c5_70 = arith.constant 5 : index
    %101 = memref.load %arg3[%c5_70] : memref<8xi32, #tpu.memory_space<smem>>
    %102 = arith.index_cast %101 : i32 to index
    %c0_71 = arith.constant 0 : index
    %103 = vector.load %arg11[%102, %c0_71] : memref<64x32xf32, #tpu.memory_space<vmem>>, vector<1x32xf32>
    %c21 = arith.constant 21 : index
    %c0_72 = arith.constant 0 : index
    %104 = vector.load %arg12[%c21, %c0_72] : memref<24x32xf32, #tpu.memory_space<vmem>>, vector<1x32xf32>
    tpu.vector_store %arg12[%c21, %c0_72], %103 {strides = array<i32>} : memref<24x32xf32, #tpu.memory_space<vmem>>, vector<1x32xf32>,
    %c6 = arith.constant 6 : index
    %105 = memref.load %arg1[%c6] : memref<8xi32, #tpu.memory_space<smem>>
    %106 = arith.index_cast %105 : i32 to index
    %c0_73 = arith.constant 0 : index
    %107 = vector.load %arg10[%106, %c0_73] : memref<48x32xf32, #tpu.memory_space<vmem>>, vector<1x32xf32>
    %c6_74 = arith.constant 6 : index
    %c0_75 = arith.constant 0 : index
    %108 = vector.load %arg12[%c6_74, %c0_75] : memref<24x32xf32, #tpu.memory_space<vmem>>, vector<1x32xf32>
    tpu.vector_store %arg12[%c6_74, %c0_75], %107 {strides = array<i32>} : memref<24x32xf32, #tpu.memory_space<vmem>>, vector<1x32xf32>,
    %c6_76 = arith.constant 6 : index
    %109 = memref.load %arg2[%c6_76] : memref<8xi32, #tpu.memory_space<smem>>
    %110 = arith.index_cast %109 : i32 to index
    %c0_77 = arith.constant 0 : index
    %111 = vector.load %arg11[%110, %c0_77] : memref<64x32xf32, #tpu.memory_space<vmem>>, vector<1x32xf32>
    %c14 = arith.constant 14 : index
    %c0_78 = arith.constant 0 : index
    %112 = vector.load %arg12[%c14, %c0_78] : memref<24x32xf32, #tpu.memory_space<vmem>>, vector<1x32xf32>
    tpu.vector_store %arg12[%c14, %c0_78], %111 {strides = array<i32>} : memref<24x32xf32, #tpu.memory_space<vmem>>, vector<1x32xf32>,
    %c6_79 = arith.constant 6 : index
    %113 = memref.load %arg3[%c6_79] : memref<8xi32, #tpu.memory_space<smem>>
    %114 = arith.index_cast %113 : i32 to index
    %c0_80 = arith.constant 0 : index
    %115 = vector.load %arg11[%114, %c0_80] : memref<64x32xf32, #tpu.memory_space<vmem>>, vector<1x32xf32>
    %c22 = arith.constant 22 : index
    %c0_81 = arith.constant 0 : index
    %116 = vector.load %arg12[%c22, %c0_81] : memref<24x32xf32, #tpu.memory_space<vmem>>, vector<1x32xf32>
    tpu.vector_store %arg12[%c22, %c0_81], %115 {strides = array<i32>} : memref<24x32xf32, #tpu.memory_space<vmem>>, vector<1x32xf32>,
    %c7 = arith.constant 7 : index
    %117 = memref.load %arg1[%c7] : memref<8xi32, #tpu.memory_space<smem>>
    %118 = arith.index_cast %117 : i32 to index
    %c0_82 = arith.constant 0 : index
    %119 = vector.load %arg10[%118, %c0_82] : memref<48x32xf32, #tpu.memory_space<vmem>>, vector<1x32xf32>
    %c7_83 = arith.constant 7 : index
    %c0_84 = arith.constant 0 : index
    %120 = vector.load %arg12[%c7_83, %c0_84] : memref<24x32xf32, #tpu.memory_space<vmem>>, vector<1x32xf32>
    tpu.vector_store %arg12[%c7_83, %c0_84], %119 {strides = array<i32>} : memref<24x32xf32, #tpu.memory_space<vmem>>, vector<1x32xf32>,
    %c7_85 = arith.constant 7 : index
    %121 = memref.load %arg2[%c7_85] : memref<8xi32, #tpu.memory_space<smem>>
    %122 = arith.index_cast %121 : i32 to index
    %c0_86 = arith.constant 0 : index
    %123 = vector.load %arg11[%122, %c0_86] : memref<64x32xf32, #tpu.memory_space<vmem>>, vector<1x32xf32>
    %c15 = arith.constant 15 : index
    %c0_87 = arith.constant 0 : index
    %124 = vector.load %arg12[%c15, %c0_87] : memref<24x32xf32, #tpu.memory_space<vmem>>, vector<1x32xf32>
    tpu.vector_store %arg12[%c15, %c0_87], %123 {strides = array<i32>} : memref<24x32xf32, #tpu.memory_space<vmem>>, vector<1x32xf32>,
    %c7_88 = arith.constant 7 : index
    %125 = memref.load %arg3[%c7_88] : memref<8xi32, #tpu.memory_space<smem>>
    %126 = arith.index_cast %125 : i32 to index
    %c0_89 = arith.constant 0 : index
    %127 = vector.load %arg11[%126, %c0_89] : memref<64x32xf32, #tpu.memory_space<vmem>>, vector<1x32xf32>
    %c23 = arith.constant 23 : index
    %c0_90 = arith.constant 0 : index
    %128 = vector.load %arg12[%c23, %c0_90] : memref<24x32xf32, #tpu.memory_space<vmem>>, vector<1x32xf32>
    tpu.vector_store %arg12[%c23, %c0_90], %127 {strides = array<i32>} : memref<24x32xf32, #tpu.memory_space<vmem>>, vector<1x32xf32>,
    %c0_91 = arith.constant 0 : index
    %c0_92 = arith.constant 0 : index
    %129 = vector.load %arg12[%c0_91, %c0_92] : memref<24x32xf32, #tpu.memory_space<vmem>>, vector<24x32xf32>
    %130 = vector.extract_strided_slice %129 {offsets = [0, 0], sizes = [8, 32], strides = [1, 1]} : vector<24x32xf32> to vector<8x32xf32>
    %131 = vector.extract_strided_slice %129 {offsets = [8, 0], sizes = [8, 32], strides = [1, 1]} : vector<24x32xf32> to vector<8x32xf32>
    %132 = vector.extract_strided_slice %129 {offsets = [16, 0], sizes = [8, 32], strides = [1, 1]} : vector<24x32xf32> to vector<8x32xf32>
    %133 = arith.mulf %130, %131 : vector<8x32xf32>
    %cst_93 = arith.constant dense<0.000000e+00> : vector<8xf32>
    %134 = vector.multi_reduction <add>, %133, %cst_93 [1] : vector<8x32xf32> to vector<8xf32>
    %135 = vector.shape_cast %134 : vector<8xf32> to vector<8x1xf32>
    %136 = arith.mulf %130, %132 : vector<8x32xf32>
    %cst_94 = arith.constant dense<0.000000e+00> : vector<8xf32>
    %137 = vector.multi_reduction <add>, %136, %cst_94 [1] : vector<8x32xf32> to vector<8xf32>
    %138 = vector.shape_cast %137 : vector<8xf32> to vector<8x1xf32>
    %139 = arith.mulf %130, %130 : vector<8x32xf32>
    %140 = arith.mulf %131, %131 : vector<8x32xf32>
    %141 = arith.addf %139, %140 : vector<8x32xf32>
    %142 = arith.mulf %132, %132 : vector<8x32xf32>
    %143 = arith.addf %141, %142 : vector<8x32xf32>
    %cst_95 = arith.constant dense<0.000000e+00> : vector<8xf32>
    %144 = vector.multi_reduction <add>, %143, %cst_95 [1] : vector<8x32xf32> to vector<8xf32>
    %145 = vector.shape_cast %144 : vector<8xf32> to vector<8x1xf32>
    %cst_96 = arith.constant 9.99999974E-5 : f32
    %146 = vector.broadcast %cst_96 : f32 to vector<8x1xf32>
    %147 = arith.mulf %146, %145 : vector<8x1xf32>
    %148 = arith.subf %135, %138 : vector<8x1xf32>
    %cst_97 = arith.constant 0.000000e+00 : f32
    %149 = vector.broadcast %cst_97 : f32 to vector<8x1xf32>
    %150 = arith.minimumf %148, %149 : vector<8x1xf32>
    %151 = math.absf %148 : vector<8x1xf32>
    %cst_98 = arith.constant 0.000000e+00 : f32
    %152 = vector.broadcast %cst_98 : f32 to vector<8x1xf32>
    %153 = arith.subf %152, %151 : vector<8x1xf32>
    %154 = math.exp %153 : vector<8x1xf32>
    %cst_99 = arith.constant 1.000000e+00 : f32
    %155 = vector.broadcast %cst_99 : f32 to vector<8x1xf32>
    %156 = arith.addf %155, %154 : vector<8x1xf32>
    %157 = math.log %156 : vector<8x1xf32>
    %158 = arith.subf %150, %157 : vector<8x1xf32>
    %159 = vector.shape_cast %158 : vector<8x1xf32> to vector<1x8x1xf32>
    %cst_100 = arith.constant dense<0.000000e+00> : vector<1xf32>
    %160 = vector.multi_reduction <add>, %159, %cst_100 [1, 2] : vector<1x8x1xf32> to vector<1xf32>
    %161 = vector.shape_cast %160 : vector<1xf32> to vector<1x1x1xf32>
    %162 = vector.extract %161[0, 0, 0] : f32 from vector<1x1x1xf32>
    %cst_101 = arith.constant 0.000000e+00 : f32
    %163 = arith.subf %cst_101, %162 : f32
    %cst_102 = arith.constant 1.250000e-01 : f32
    %164 = arith.mulf %163, %cst_102 : f32
    %165 = vector.shape_cast %147 : vector<8x1xf32> to vector<1x8x1xf32>
    %cst_103 = arith.constant dense<0.000000e+00> : vector<1xf32>
    %166 = vector.multi_reduction <add>, %165, %cst_103 [1, 2] : vector<1x8x1xf32> to vector<1xf32>
    %167 = vector.shape_cast %166 : vector<1xf32> to vector<1x1x1xf32>
    %168 = vector.extract %167[0, 0, 0] : f32 from vector<1x1x1xf32>
    %cst_104 = arith.constant 1.250000e-01 : f32
    %169 = arith.mulf %168, %cst_104 : f32
    %170 = arith.addf %164, %169 : f32
    %171 = tpu.iota {dimensions = array<i32: 1>} : vector<8x128xi32>
    %c0_i32 = arith.constant 0 : i32
    %172 = vector.broadcast %c0_i32 : i32 to vector<8x128xi32>
    %173 = arith.cmpi eq, %171, %172 : vector<8x128xi32>
    %cst_105 = arith.constant 0.000000e+00 : f32
    %174 = vector.shape_cast %135 : vector<8x1xf32> to vector<8x1xf32>
    %175 = vector.broadcast %174 : vector<8x1xf32> to vector<8x128xf32>
    %176 = vector.broadcast %cst_105 : f32 to vector<8x128xf32>
    %177 = arith.select %173, %175, %176 : vector<8x128xi1>, vector<8x128xf32>
    %c1_i32 = arith.constant 1 : i32
    %178 = vector.broadcast %c1_i32 : i32 to vector<8x128xi32>
    %179 = arith.cmpi eq, %171, %178 : vector<8x128xi32>
    %180 = vector.shape_cast %138 : vector<8x1xf32> to vector<8x1xf32>
    %181 = vector.broadcast %180 : vector<8x1xf32> to vector<8x128xf32>
    %182 = arith.select %179, %181, %177 : vector<8x128xi1>, vector<8x128xf32>
    %c2_i32 = arith.constant 2 : i32
    %183 = vector.broadcast %c2_i32 : i32 to vector<8x128xi32>
    %184 = arith.cmpi eq, %171, %183 : vector<8x128xi32>
    %185 = vector.broadcast %170 : f32 to vector<8x128xf32>
    %186 = arith.select %184, %185, %182 : vector<8x128xi1>, vector<8x128xf32>
    %c3_i32 = arith.constant 3 : i32
    %187 = vector.broadcast %c3_i32 : i32 to vector<8x128xi32>
    %188 = arith.cmpi eq, %171, %187 : vector<8x128xi32>
    %189 = vector.broadcast %164 : f32 to vector<8x128xf32>
    %190 = arith.select %188, %189, %186 : vector<8x128xi1>, vector<8x128xf32>
    %c0_106 = arith.constant 0 : index
    %c0_107 = arith.constant 0 : index
    %191 = vector.load %arg9[%c0_106, %c0_107] : memref<8x128xf32, #tpu.memory_space<vmem>>, vector<8x128xf32>
    tpu.vector_store %arg9[%c0_106, %c0_107], %190 {strides = array<i32>} : memref<8x128xf32, #tpu.memory_space<vmem>>, vector<8x128xf32>,
    return
  }
  func.func @transform_0(%arg0: i32) -> i32 {
    %c0_i32 = arith.constant 0 : i32
    %c0_i32_0 = arith.constant 0 : i32
    return %c0_i32 : i32
  }
  func.func @transform_1(%arg0: i32) -> i32 {
    %c0_i32 = arith.constant 0 : i32
    %c0_i32_0 = arith.constant 0 : i32
    return %c0_i32 : i32
  }
  func.func @transform_2(%arg0: i32) -> i32 {
    %c0_i32 = arith.constant 0 : i32
    %c0_i32_0 = arith.constant 0 : i32
    return %c0_i32 : i32
  }
  func.func @transform_3(%arg0: i32) -> (i32, i32) {
    %c0_i32 = arith.constant 0 : i32
    %c0_i32_0 = arith.constant 0 : i32
    %c0_i32_1 = arith.constant 0 : i32
    return %c0_i32, %c0_i32_0 : i32, i32
  }
  func.func @transform_4(%arg0: i32) -> (i32, i32) {
    %c0_i32 = arith.constant 0 : i32
    %c0_i32_0 = arith.constant 0 : i32
    %c0_i32_1 = arith.constant 0 : i32
    return %c0_i32, %c0_i32_0 : i32, i32
  }
  func.func @transform_5(%arg0: i32) -> (i32, i32) {
    %c0_i32 = arith.constant 0 : i32
    %c0_i32_0 = arith.constant 0 : i32
    %c0_i32_1 = arith.constant 0 : i32
    return %c0_i32, %c0_i32_0 : i32, i32
  }
  func.func @transform_6(%arg0: i32) -> (i32, i32) {
    %c0_i32 = arith.constant 0 : i32
    %c0_i32_0 = arith.constant 0 : i32
    %c0_i32_1 = arith.constant 0 : i32
    return %c0_i32, %c0_i32_0 : i32, i32
  }
  func.func @transform_7(%arg0: i32) -> (i32, i32) {
    %c0_i32 = arith.constant 0 : i32
    %c0_i32_0 = arith.constant 0 : i32
    %c0_i32_1 = arith.constant 0 : i32
    return %c0_i32, %c0_i32_0 : i32, i32
  }
  func.func @transform_8(%arg0: i32) -> (i32, i32) {
    %c0_i32 = arith.constant 0 : i32
    %c0_i32_0 = arith.constant 0 : i32
    %c0_i32_1 = arith.constant 0 : i32
    return %c0_i32, %c0_i32_0 : i32, i32
  }
}

</mosaic_0001>

<llo_original>
// kernel: bpr_forward.1
$region0: #{bpr_forward.1}
  #allocation0 [shape = 'u32[]', space=smem, size = 0x4, offset = 0x4, fixed_abs, tag = 'smem constant byte address 0x4 - core index']
  #allocation1 [shape = 'u32[144,128]{1,0:T(1,128)}', space=vmem, size = 0x12000, scoped, tag = 'internal scratch']
  #allocation2 [shape = 'f32[48,32]{1,0:T(8,128)}', space=vmem, size = 0x6000, scoped, tag = 'scratch operand']
  #allocation3 [shape = 'f32[64,32]{1,0:T(8,128)}', space=vmem, size = 0x8000, scoped, tag = 'scratch operand']
  #allocation4 [shape = 'f32[24,32]{1,0:T(8,128)}', space=vmem, size = 0x3000, scoped, tag = 'scratch operand']
  %s0 = inlined_call_operand.vmem [shape: s32[8], index: 0, kind: input, shape index: {}]
  %s1 = inlined_call_operand.vmem [shape: s32[8], index: 1, kind: input, shape index: {}]
  %s2 = inlined_call_operand.vmem [shape: s32[8], index: 2, kind: input, shape index: {}]
  %s3 = inlined_call_operand.vmem [shape: bf16[96,64], index: 3, kind: input, shape index: {}]
  %s4 = inlined_call_operand.vmem [shape: bf16[128,48], index: 4, kind: input, shape index: {}]
  %s5 = inlined_call_operand.vmem [shape: f32[48,32], index: 5, kind: input, shape index: {}]
  %s6 = inlined_call_operand.vmem [shape: f32[64,32], index: 6, kind: input, shape index: {}]
  %s7 = inlined_call_operand.vmem [shape: f32[48,1], index: 7, kind: input, shape index: {}]
  %s8 = inlined_call_operand.vmem [shape: f32[8,128], index: 8, kind: output, shape index: {}]
  %s9 = sld [smem:[#allocation0]]
  $region54: #{bpr_forward.1} parent=0
    _
  %s11 = ssub.s32 1, %s9
  %s12 = scalar_select 0, %s11, %s9
  $region1: #{bpr_forward.1} parent=0
    #allocation5 [shape = 'u8[512]{0}', space=smem, size = 0x200, scoped, tag = 'input window, operand 0, single buffered']
    #allocation6 [shape = 's32[1]{0}', space=sflag, size = 0x4, scoped, tag = 'scoped memory for bpr_forward.1']
    #allocation7 [shape = 'u8[512]{0}', space=smem, size = 0x200, scoped, tag = 'input window, operand 1, single buffered']
    #allocation8 [shape = 's32[1]{0}', space=sflag, size = 0x4, scoped, tag = 'scoped memory for bpr_forward.1']
    #allocation9 [shape = 'u8[512]{0}', space=smem, size = 0x200, scoped, tag = 'input window, operand 2, single buffered']
    %13 = vsyncpa [#allocation6], 0
    %14 = vsyncpa [#allocation8], 0
    // Predicated region
    $region2: #{bpr_forward.1} parent=1 // pred_check
      _
    $region3: #{bpr_forward.1} parent=1 // pred_check_branch
      %16 = sbr.rel (0) target = $region5
    $region4: #{bpr_forward.1} parent=1 // pred_region
      %s18 = ssub.s32 16, 16
      %19 = vsyncadd [#allocation6], %s18
      %s21 = sshll.u32 %s0, 4
      %s22 = int_to_ptr.vmem [resolvable:$true] %s21
      %24 = dma.vmem_to_smem %s22, 16, [#allocation5], [#allocation6]
    $region5: #{bpr_forward.1} parent=1 // pred_fallthru
      _
    // Predicated region
    $region6: #{bpr_forward.1} parent=1 // pred_check
      _
    $region7: #{bpr_forward.1} parent=1 // pred_check_branch
      %26 = sbr.rel (0) target = $region9
    $region8: #{bpr_forward.1} parent=1 // pred_region
      %s28 = ssub.s32 16, 16
      %29 = vsyncadd [#allocation8], %s28
      %s31 = sshll.u32 %s1, 4
      %s32 = int_to_ptr.vmem [resolvable:$true] %s31
      %34 = dma.vmem_to_smem %s32, 16, [#allocation7], [#allocation8]
    $region9: #{bpr_forward.1} parent=1 // pred_fallthru
      _
    // Predicated region
    $region10: #{bpr_forward.1} parent=1 // pred_check
      _
    $region11: #{bpr_forward.1} parent=1 // pred_check_branch
      %36 = sbr.rel (0) target = $region13
    $region12: #{bpr_forward.1} parent=1 // pred_region
      %s38 = ssub.s32 16, 16
      %39 = vsyncadd [#allocation8], %s38
      %s41 = sshll.u32 %s2, 4
      %s42 = int_to_ptr.vmem [resolvable:$true] %s41
      %44 = dma.vmem_to_smem %s42, 16, [#allocation9], [#allocation8]
    $region13: #{bpr_forward.1} parent=1 // pred_fallthru
      _
    // Predicated region
    $region14: #{bpr_forward.1} parent=1 // pred_check
      _
    $region15: #{bpr_forward.1} parent=1 // pred_check_branch
      %46 = sbr.rel (0) target = $region17
    $region16: #{bpr_forward.1} parent=1 // pred_region
      _
    $region17: #{bpr_forward.1} parent=1 // pred_fallthru
      _
    // Predicated region
    $region18: #{bpr_forward.1} parent=1 // pred_check
      _
    $region19: #{bpr_forward.1} parent=1 // pred_check_branch
      %48 = sbr.rel (0) target = $region21
    $region20: #{bpr_forward.1} parent=1 // pred_region
      _
    $region21: #{bpr_forward.1} parent=1 // pred_fallthru
      _
    // Predicated region
    $region22: #{bpr_forward.1} parent=1 // pred_check
      _
    $region23: #{bpr_forward.1} parent=1 // pred_check_branch
      %50 = sbr.rel (0) target = $region25
    $region24: #{bpr_forward.1} parent=1 // pred_region
      _
    $region25: #{bpr_forward.1} parent=1 // pred_fallthru
      _
    // Predicated region
    $region26: #{bpr_forward.1} parent=1 // pred_check
      _
    $region27: #{bpr_forward.1} parent=1 // pred_check_branch
      %52 = sbr.rel (0) target = $region29
    $region28: #{bpr_forward.1} parent=1 // pred_region
      _
    $region29: #{bpr_forward.1} parent=1 // pred_fallthru
      _
    // Predicated region
    $region30: #{bpr_forward.1} parent=1 // pred_check
      _
    $region31: #{bpr_forward.1} parent=1 // pred_check_branch
      %54 = sbr.rel (0) target = $region33
    $region32: #{bpr_forward.1} parent=1 // pred_region
      _
    $region33: #{bpr_forward.1} parent=1 // pred_fallthru
      _
    // Predicated region
    $region34: #{bpr_forward.1} parent=1 // pred_check
      _
    $region35: #{bpr_forward.1} parent=1 // pred_check_branch
      %56 = sbr.rel (0) target = $region37
    $region36: #{bpr_forward.1} parent=1 // pred_region
      %57 = dma.done [#allocation6], 16
    $region37: #{bpr_forward.1} parent=1 // pred_fallthru
      _
    // Predicated region
    $region38: #{bpr_forward.1} parent=1 // pred_check
      _
    $region39: #{bpr_forward.1} parent=1 // pred_check_branch
      %59 = sbr.rel (0) target = $region41
    $region40: #{bpr_forward.1} parent=1 // pred_region
      %60 = dma.done [#allocation8], 16
    $region41: #{bpr_forward.1} parent=1 // pred_fallthru
      _
    // Predicated region
    $region42: #{bpr_forward.1} parent=1 // pred_check
      _
    $region43: #{bpr_forward.1} parent=1 // pred_check_branch
      %62 = sbr.rel (0) target = $region45
    $region44: #{bpr_forward.1} parent=1 // pred_region
      %63 = dma.done [#allocation8], 16
    $region45: #{bpr_forward.1} parent=1 // pred_fallthru
      _
    %64 = sfence
    %v66 = vld [vmem:[%s5] sm:$0xff]
    %v67 = vld [vmem:[%s5 + $0x8] sm:$0xff]
    %v68 = vld [vmem:[%s5 + $0x10] sm:$0xff]
    %v69 = vld [vmem:[%s5 + $0x18] sm:$0xff]
    %v70 = vld [vmem:[%s5 + $0x20] sm:$0xff]
    %v71 = vld [vmem:[%s5 + $0x28] sm:$0xff]
    %v72 = vld [vmem:[%s6] sm:$0xff]
    %v73 = vld [vmem:[%s6 + $0x8] sm:$0xff]
    %v74 = vld [vmem:[%s6 + $0x10] sm:$0xff]
    %v75 = vld [vmem:[%s6 + $0x18] sm:$0xff]
    %v76 = vld [vmem:[%s6 + $0x20] sm:$0xff]
    %v77 = vld [vmem:[%s6 + $0x28] sm:$0xff]
    %v78 = vld [vmem:[%s6 + $0x30] sm:$0xff]
    %v79 = vld [vmem:[%s6 + $0x38] sm:$0xff]
    %v80 = vpack.c.bf16 %v67, %v66
    %v81 = vpack.c.bf16 %v69, %v68
    %v82 = vpack.c.bf16 %v71, %v70
    %v83 = vpack.c.bf16 %v73, %v72
    %v84 = vpack.c.bf16 %v75, %v74
    %v85 = vpack.c.bf16 %v77, %v76
    %v86 = vpack.c.bf16 %v79, %v78
    %v87 = vld [vmem:[%s3] sm:$0xf]
    %v88 = vld [vmem:[%s3 + $0x4] sm:$0xf]
    %v89 = vld [vmem:[%s3 + $0x8] sm:$0xf]
    %v90 = vld [vmem:[%s3 + $0xc] sm:$0xf]
    %v91 = vld [vmem:[%s3 + $0x10] sm:$0xf]
    %v92 = vld [vmem:[%s3 + $0x14] sm:$0xf]
    %v93 = vld [vmem:[%s3 + $0x18] sm:$0xf]
    %v94 = vld [vmem:[%s3 + $0x1c] sm:$0xf]
    %v95 = vld [vmem:[%s3 + $0x20] sm:$0xf]
    %v96 = vld [vmem:[%s3 + $0x24] sm:$0xf]
    %v97 = vld [vmem:[%s3 + $0x28] sm:$0xf]
    %v98 = vld [vmem:[%s3 + $0x2c] sm:$0xf]
    %v99 = vld [vmem:[%s4] sm:$0xf]
    %v100 = vld [vmem:[%s4 + $0x4] sm:$0xf]
    %v101 = vld [vmem:[%s4 + $0x8] sm:$0xf]
    %v102 = vld [vmem:[%s4 + $0xc] sm:$0xf]
    %v103 = vld [vmem:[%s4 + $0x10] sm:$0xf]
    %v104 = vld [vmem:[%s4 + $0x14] sm:$0xf]
    %v105 = vld [vmem:[%s4 + $0x18] sm:$0xf]
    %v106 = vld [vmem:[%s4 + $0x1c] sm:$0xf]
    %v107 = vld [vmem:[%s4 + $0x20] sm:$0xf]
    %v108 = vld [vmem:[%s4 + $0x24] sm:$0xf]
    %v109 = vld [vmem:[%s4 + $0x28] sm:$0xf]
    %v110 = vld [vmem:[%s4 + $0x2c] sm:$0xf]
    %v111 = vld [vmem:[%s4 + $0x30] sm:$0xf]
    %v112 = vld [vmem:[%s4 + $0x34] sm:$0xf]
    %v113 = vld [vmem:[%s4 + $0x38] sm:$0xf]
    %v114 = vld [vmem:[%s4 + $0x3c] sm:$0xf]
    %v127 = vunpack.c.l.b16 %v87
    %v128 = vunpack.c.l.b16 %v88
    %v129 = vunpack.c.l.b16 %v89
    %v130 = vunpack.c.l.b16 %v90
    %v131 = vunpack.c.l.b16 %v91
    %v132 = vunpack.c.l.b16 %v92
    %v133 = vunpack.c.l.b16 %v93
    %v134 = vunpack.c.l.b16 %v94
    %v135 = vunpack.c.l.b16 %v95
    %v136 = vunpack.c.l.b16 %v96
    %v137 = vunpack.c.l.b16 %v97
    %v138 = vunpack.c.l.b16 %v98
    %v139 = vpack.c.b16 %v128, %v127
    %v140 = vpack.c.b16 %v130, %v129
    %v141 = vpack.c.b16 %v132, %v131
    %v142 = vpack.c.b16 %v134, %v133
    %v143 = vpack.c.b16 %v136, %v135
    %v144 = vpack.c.b16 %v138, %v137
    %vm145 = vcmask 523264
    %v147 = vsel %vm145, %v139, 0
    %v150 = vsel %vm145, %v140, 0
    %v153 = vsel %vm145, %v141, 0
    %v156 = vsel %vm145, %v142, 0
    %v159 = vsel %vm145, %v143, 0
    %v162 = vsel %vm145, %v144, 0
    %164 = vmatprep.subr.bf16.mxu0 0
    %165 = vmatpush1.bf16.msra.mxu0 %v83
    %166 = vmatprep.subr.bf16.mxu0 0
    %167 = vmatpush1.bf16.msra.mxu0 %v84
    %168 = vmatprep.subr.bf16.mxu0 0
    %169 = vmatpush1.bf16.msra.mxu0 %v85
    %170 = vmatprep.subr.bf16.mxu0 0
    %171 = vmatpush1.bf16.msra.mxu0 %v86
    %172 = vmatprep.subr.bf16.mxu0 0
    %173 = vmatpush1.bf16.msra.mxu0 0
    %174 = vmatprep.subr.bf16.mxu0 0
    %175 = vmatpush1.bf16.msra.mxu0 0
    %176 = vmatprep.subr.bf16.mxu0 0
    %177 = vmatpush1.bf16.msra.mxu0 0
    %178 = vmatprep.subr.bf16.mxu0 0
    %179 = vmatpush1.bf16.msra.mxu0 0
    %180 = vmatprep.subr.bf16.mxu0 0
    %181 = vmatpush1.bf16.msra.mxu0 0
    %182 = vmatprep.subr.bf16.mxu0 0
    %183 = vmatpush1.bf16.msra.mxu0 0
    %184 = vmatprep.subr.bf16.mxu0 0
    %185 = vmatpush1.bf16.msra.mxu0 0
    %186 = vmatprep.subr.bf16.mxu0 0
    %187 = vmatpush1.bf16.msra.mxu0 0
    %188 = vmatprep.subr.bf16.mxu0 0
    %189 = vmatpush1.bf16.msra.mxu0 0
    %190 = vmatprep.subr.bf16.mxu0 0
    %191 = vmatpush1.bf16.msra.mxu0 0
    %192 = vmatprep.subr.bf16.mxu0 0
    %193 = vmatpush1.bf16.msra.mxu0 0
    %194 = vmatprep.subr.bf16.mxu0 0
    %195 = vmatpush1.bf16.msra.mxu0 0
    %196 = vmatprep.mubr.bf16.mxu0 0
    %197 = vmatmul.mubr.bf16.gmra.mrb[0].mxu0 %v147
    %v198 = vpop.f32.mrb[0].mxu0
    %v199 = vadd.f32 0.0, %v198
    %v200 = vpop.f32.mrb[0].mxu0
    %v201 = vpop.f32.mrb[0].mxu0
    %v202 = vadd.f32 0.0, %v201
    %v203 = vpop.f32.mrb[0].mxu0
    %204 = vmatprep.mubr.bf16.mxu0 0
    %205 = vmatmul.mubr.bf16.gmra.mrb[0].mxu0 %v150
    %v206 = vpop.f32.mrb[0].mxu0
    %v207 = vadd.f32 0.0, %v206
    %v208 = vpop.f32.mrb[0].mxu0
    %v209 = vpop.f32.mrb[0].mxu0
    %v210 = vadd.f32 0.0, %v209
    %v211 = vpop.f32.mrb[0].mxu0
    %212 = vmatprep.mubr.bf16.mxu0 0
    %213 = vmatmul.mubr.bf16.gmra.mrb[0].mxu0 %v153
    %v214 = vpop.f32.mrb[0].mxu0
    %v215 = vadd.f32 0.0, %v214
    %v216 = vpop.f32.mrb[0].mxu0
    %v217 = vpop.f32.mrb[0].mxu0
    %v218 = vadd.f32 0.0, %v217
    %v219 = vpop.f32.mrb[0].mxu0
    %220 = vmatprep.mubr.bf16.mxu0 0
    %221 = vmatmul.mubr.bf16.gmra.mrb[0].mxu0 %v156
    %v222 = vpop.f32.mrb[0].mxu0
    %v223 = vadd.f32 0.0, %v222
    %v224 = vpop.f32.mrb[0].mxu0
    %v225 = vpop.f32.mrb[0].mxu0
    %v226 = vadd.f32 0.0, %v225
    %v227 = vpop.f32.mrb[0].mxu0
    %228 = vmatprep.mubr.bf16.mxu0 0
    %229 = vmatmul.mubr.bf16.gmra.mrb[0].mxu0 %v159
    %v230 = vpop.f32.mrb[0].mxu0
    %v231 = vadd.f32 0.0, %v230
    %v232 = vpop.f32.mrb[0].mxu0
    %v233 = vpop.f32.mrb[0].mxu0
    %v234 = vadd.f32 0.0, %v233
    %v235 = vpop.f32.mrb[0].mxu0
    %236 = vmatprep.mubr.bf16.mxu0 0
    %237 = vmatmul.mubr.bf16.gmra.mrb[0].mxu0 %v162
    %v238 = vpop.f32.mrb[0].mxu0
    %v239 = vadd.f32 0.0, %v238
    %v240 = vpop.f32.mrb[0].mxu0
    %v241 = vpop.f32.mrb[0].mxu0
    %v242 = vadd.f32 0.0, %v241
    %v243 = vpop.f32.mrb[0].mxu0
    %244 = vdwg.mxu0
    %v261 = vunpack.c.l.b16 %v99
    %v262 = vunpack.c.l.b16 %v100
    %v263 = vunpack.c.l.b16 %v101
    %v264 = vunpack.c.l.b16 %v102
    %v265 = vunpack.c.l.b16 %v103
    %v266 = vunpack.c.l.b16 %v104
    %v267 = vunpack.c.l.b16 %v105
    %v268 = vunpack.c.l.b16 %v106
    %v269 = vunpack.c.l.b16 %v107
    %v270 = vunpack.c.l.b16 %v108
    %v271 = vunpack.c.l.b16 %v109
    %v272 = vunpack.c.l.b16 %v110
    %v273 = vunpack.c.l.b16 %v111
    %v274 = vunpack.c.l.b16 %v112
    %v275 = vunpack.c.l.b16 %v113
    %v276 = vunpack.c.l.b16 %v114
    %v277 = vpack.c.b16 %v262, %v261
    %v278 = vpack.c.b16 %v264, %v263
    %v279 = vpack.c.b16 %v266, %v265
    %v280 = vpack.c.b16 %v268, %v267
    %v281 = vpack.c.b16 %v270, %v269
    %v282 = vpack.c.b16 %v272, %v271
    %v283 = vpack.c.b16 %v274, %v273
    %v284 = vpack.c.b16 %v276, %v275
    %vm285 = vcmask 392192
    %v287 = vsel %vm285, %v277, 0
    %v290 = vsel %vm285, %v278, 0
    %v293 = vsel %vm285, %v279, 0
    %v296 = vsel %vm285, %v280, 0
    %v299 = vsel %vm285, %v281, 0
    %v302 = vsel %vm285, %v282, 0
    %v305 = vsel %vm285, %v283, 0
    %v308 = vsel %vm285, %v284, 0
    %310 = vmatprep.subr.bf16.mxu0 0
    %311 = vmatpush1.bf16.msra.mxu0 %v80
    %312 = vmatprep.subr.bf16.mxu0 0
    %313 = vmatpush1.bf16.msra.mxu0 %v81
    %314 = vmatprep.subr.bf16.mxu0 0
    %315 = vmatpush1.bf16.msra.mxu0 %v82
    %316 = vmatprep.subr.bf16.mxu0 0
    %317 = vmatpush1.bf16.msra.mxu0 0
    %318 = vmatprep.subr.bf16.mxu0 0
    %319 = vmatpush1.bf16.msra.mxu0 0
    %320 = vmatprep.subr.bf16.mxu0 0
    %321 = vmatpush1.bf16.msra.mxu0 0
    %322 = vmatprep.subr.bf16.mxu0 0
    %323 = vmatpush1.bf16.msra.mxu0 0
    %324 = vmatprep.subr.bf16.mxu0 0
    %325 = vmatpush1.bf16.msra.mxu0 0
    %326 = vmatprep.subr.bf16.mxu0 0
    %327 = vmatpush1.bf16.msra.mxu0 0
    %328 = vmatprep.subr.bf16.mxu0 0
    %329 = vmatpush1.bf16.msra.mxu0 0
    %330 = vmatprep.subr.bf16.mxu0 0
    %331 = vmatpush1.bf16.msra.mxu0 0
    %332 = vmatprep.subr.bf16.mxu0 0
    %333 = vmatpush1.bf16.msra.mxu0 0
    %334 = vmatprep.subr.bf16.mxu0 0
    %335 = vmatpush1.bf16.msra.mxu0 0
    %336 = vmatprep.subr.bf16.mxu0 0
    %337 = vmatpush1.bf16.msra.mxu0 0
    %338 = vmatprep.subr.bf16.mxu0 0
    %339 = vmatpush1.bf16.msra.mxu0 0
    %340 = vmatprep.subr.bf16.mxu0 0
    %341 = vmatpush1.bf16.msra.mxu0 0
    %342 = vmatprep.mubr.bf16.mxu0 0
    %343 = vmatmul.mubr.bf16.gmra.mrb[0].mxu0 %v287
    %v344 = vpop.f32.mrb[0].mxu0
    %v345 = vadd.f32 0.0, %v344
    %v346 = vpop.f32.mrb[0].mxu0
    %v347 = vpop.f32.mrb[0].mxu0
    %v348 = vadd.f32 0.0, %v347
    %v349 = vpop.f32.mrb[0].mxu0
    %350 = vmatprep.mubr.bf16.mxu0 0
    %351 = vmatmul.mubr.bf16.gmra.mrb[0].mxu0 %v290
    %v352 = vpop.f32.mrb[0].mxu0
    %v353 = vadd.f32 0.0, %v352
    %v354 = vpop.f32.mrb[0].mxu0
    %v355 = vpop.f32.mrb[0].mxu0
    %v356 = vadd.f32 0.0, %v355
    %v357 = vpop.f32.mrb[0].mxu0
    %358 = vmatprep.mubr.bf16.mxu0 0
    %359 = vmatmul.mubr.bf16.gmra.mrb[0].mxu0 %v293
    %v360 = vpop.f32.mrb[0].mxu0
    %v361 = vadd.f32 0.0, %v360
    %v362 = vpop.f32.mrb[0].mxu0
    %v363 = vpop.f32.mrb[0].mxu0
    %v364 = vadd.f32 0.0, %v363
    %v365 = vpop.f32.mrb[0].mxu0
    %366 = vmatprep.mubr.bf16.mxu0 0
    %367 = vmatmul.mubr.bf16.gmra.mrb[0].mxu0 %v296
    %v368 = vpop.f32.mrb[0].mxu0
    %v369 = vadd.f32 0.0, %v368
    %v370 = vpop.f32.mrb[0].mxu0
    %v371 = vpop.f32.mrb[0].mxu0
    %v372 = vadd.f32 0.0, %v371
    %v373 = vpop.f32.mrb[0].mxu0
    %374 = vmatprep.mubr.bf16.mxu0 0
    %375 = vmatmul.mubr.bf16.gmra.mrb[0].mxu0 %v299
    %v376 = vpop.f32.mrb[0].mxu0
    %v377 = vadd.f32 0.0, %v376
    %v378 = vpop.f32.mrb[0].mxu0
    %v379 = vpop.f32.mrb[0].mxu0
    %v380 = vadd.f32 0.0, %v379
    %v381 = vpop.f32.mrb[0].mxu0
    %382 = vmatprep.mubr.bf16.mxu0 0
    %383 = vmatmul.mubr.bf16.gmra.mrb[0].mxu0 %v302
    %v384 = vpop.f32.mrb[0].mxu0
    %v385 = vadd.f32 0.0, %v384
    %v386 = vpop.f32.mrb[0].mxu0
    %v387 = vpop.f32.mrb[0].mxu0
    %v388 = vadd.f32 0.0, %v387
    %v389 = vpop.f32.mrb[0].mxu0
    %390 = vmatprep.mubr.bf16.mxu0 0
    %391 = vmatmul.mubr.bf16.gmra.mrb[0].mxu0 %v305
    %v392 = vpop.f32.mrb[0].mxu0
    %v393 = vadd.f32 0.0, %v392
    %v394 = vpop.f32.mrb[0].mxu0
    %v395 = vpop.f32.mrb[0].mxu0
    %v396 = vadd.f32 0.0, %v395
    %v397 = vpop.f32.mrb[0].mxu0
    %398 = vmatprep.mubr.bf16.mxu0 0
    %399 = vmatmul.mubr.bf16.gmra.mrb[0].mxu0 %v308
    %v400 = vpop.f32.mrb[0].mxu0
    %v401 = vadd.f32 0.0, %v400
    %v402 = vpop.f32.mrb[0].mxu0
    %v403 = vpop.f32.mrb[0].mxu0
    %v404 = vadd.f32 0.0, %v403
    %v405 = vpop.f32.mrb[0].mxu0
    %406 = vdwg.mxu0
    %v407 = vpack.c.bf16 %v348, %v345
    %v408 = vpack.c.bf16 %v356, %v353
    %v409 = vpack.c.bf16 %v364, %v361
    %v410 = vpack.c.bf16 %v372, %v369
    %411 = vmatprep.subr.bf16.mxu0 0
    %412 = vmatpush1.bf16.msra.mxu0 %v407
    %413 = vmatprep.subr.bf16.mxu0 0
    %414 = vmatpush1.bf16.msra.mxu0 %v408
    %415 = vmatprep.subr.bf16.mxu0 0
    %416 = vmatpush1.bf16.msra.mxu0 %v409
    %417 = vmatprep.subr.bf16.mxu0 0
    %418 = vmatpush1.bf16.msra.mxu0 %v410
    %419 = vmatprep.subr.bf16.mxu0 0
    %420 = vmatpush1.bf16.msra.mxu0 0
    %421 = vmatprep.subr.bf16.mxu0 0
    %422 = vmatpush1.bf16.msra.mxu0 0
    %423 = vmatprep.subr.bf16.mxu0 0
    %424 = vmatpush1.bf16.msra.mxu0 0
    %425 = vmatprep.subr.bf16.mxu0 0
    %426 = vmatpush1.bf16.msra.mxu0 0
    %427 = vmatprep.subr.bf16.mxu0 0
    %428 = vmatpush1.bf16.msra.mxu0 0
    %429 = vmatprep.subr.bf16.mxu0 0
    %430 = vmatpush1.bf16.msra.mxu0 0
    %431 = vmatprep.subr.bf16.mxu0 0
    %432 = vmatpush1.bf16.msra.mxu0 0
    %433 = vmatprep.subr.bf16.mxu0 0
    %434 = vmatpush1.bf16.msra.mxu0 0
    %435 = vmatprep.subr.bf16.mxu0 0
    %436 = vmatpush1.bf16.msra.mxu0 0
    %437 = vmatprep.subr.bf16.mxu0 0
    %438 = vmatpush1.bf16.msra.mxu0 0
    %439 = vmatprep.subr.bf16.mxu0 0
    %440 = vmatpush1.bf16.msra.mxu0 0
    %441 = vmatprep.subr.bf16.mxu0 0
    %442 = vmatpush1.bf16.msra.mxu0 0
    %443 = vmatprep.mubr.bf16.mxu0 0
    %444 = vmatmul.mubr.bf16.gmra.mrb[0].mxu0 %v147
    %v445 = vpop.f32.mrb[0].mxu0
    %v446 = vadd.f32 0.0, %v445
    %v447 = vpop.f32.mrb[0].mxu0
    %v448 = vpop.f32.mrb[0].mxu0
    %v449 = vadd.f32 0.0, %v448
    %v450 = vpop.f32.mrb[0].mxu0
    %451 = vmatprep.mubr.bf16.mxu0 0
    %452 = vmatmul.mubr.bf16.gmra.mrb[0].mxu0 %v150
    %v453 = vpop.f32.mrb[0].mxu0
    %v454 = vadd.f32 0.0, %v453
    %v455 = vpop.f32.mrb[0].mxu0
    %v456 = vpop.f32.mrb[0].mxu0
    %v457 = vadd.f32 0.0, %v456
    %v458 = vpop.f32.mrb[0].mxu0
    %459 = vmatprep.mubr.bf16.mxu0 0
    %460 = vmatmul.mubr.bf16.gmra.mrb[0].mxu0 %v153
    %v461 = vpop.f32.mrb[0].mxu0
    %v462 = vadd.f32 0.0, %v461
    %v463 = vpop.f32.mrb[0].mxu0
    %v464 = vpop.f32.mrb[0].mxu0
    %v465 = vadd.f32 0.0, %v464
    %v466 = vpop.f32.mrb[0].mxu0
    %467 = vdwg.mxu0
    %v468 = vpack.c.bf16 %v202, %v199
    %v469 = vpack.c.bf16 %v210, %v207
    %v470 = vpack.c.bf16 %v218, %v215
    %471 = vmatprep.subr.bf16.mxu0 0
    %472 = vmatpush1.bf16.msra.mxu0 %v468
    %473 = vmatprep.subr.bf16.mxu0 0
    %474 = vmatpush1.bf16.msra.mxu0 %v469
    %475 = vmatprep.subr.bf16.mxu0 0
    %476 = vmatpush1.bf16.msra.mxu0 %v470
    %477 = vmatprep.subr.bf16.mxu0 0
    %478 = vmatpush1.bf16.msra.mxu0 0
    %479 = vmatprep.subr.bf16.mxu0 0
    %480 = vmatpush1.bf16.msra.mxu0 0
    %481 = vmatprep.subr.bf16.mxu0 0
    %482 = vmatpush1.bf16.msra.mxu0 0
    %483 = vmatprep.subr.bf16.mxu0 0
    %484 = vmatpush1.bf16.msra.mxu0 0
    %485 = vmatprep.subr.bf16.mxu0 0
    %486 = vmatpush1.bf16.msra.mxu0 0
    %487 = vmatprep.subr.bf16.mxu0 0
    %488 = vmatpush1.bf16.msra.mxu0 0
    %489 = vmatprep.subr.bf16.mxu0 0
    %490 = vmatpush1.bf16.msra.mxu0 0
    %491 = vmatprep.subr.bf16.mxu0 0
    %492 = vmatpush1.bf16.msra.mxu0 0
    %493 = vmatprep.subr.bf16.mxu0 0
    %494 = vmatpush1.bf16.msra.mxu0 0
    %495 = vmatprep.subr.bf16.mxu0 0
    %496 = vmatpush1.bf16.msra.mxu0 0
    %497 = vmatprep.subr.bf16.mxu0 0
    %498 = vmatpush1.bf16.msra.mxu0 0
    %499 = vmatprep.subr.bf16.mxu0 0
    %500 = vmatpush1.bf16.msra.mxu0 0
    %501 = vmatprep.subr.bf16.mxu0 0
    %502 = vmatpush1.bf16.msra.mxu0 0
    %503 = vmatprep.mubr.bf16.mxu0 0
    %504 = vmatmul.mubr.bf16.gmra.mrb[0].mxu0 %v287
    %v505 = vpop.f32.mrb[0].mxu0
    %v506 = vadd.f32 0.0, %v505
    %v507 = vpop.f32.mrb[0].mxu0
    %v508 = vpop.f32.mrb[0].mxu0
    %v509 = vadd.f32 0.0, %v508
    %v510 = vpop.f32.mrb[0].mxu0
    %511 = vmatprep.mubr.bf16.mxu0 0
    %512 = vmatmul.mubr.bf16.gmra.mrb[0].mxu0 %v290
    %v513 = vpop.f32.mrb[0].mxu0
    %v514 = vadd.f32 0.0, %v513
    %v515 = vpop.f32.mrb[0].mxu0
    %v516 = vpop.f32.mrb[0].mxu0
    %v517 = vadd.f32 0.0, %v516
    %v518 = vpop.f32.mrb[0].mxu0
    %519 = vmatprep.mubr.bf16.mxu0 0
    %520 = vmatmul.mubr.bf16.gmra.mrb[0].mxu0 %v293
    %v521 = vpop.f32.mrb[0].mxu0
    %v522 = vadd.f32 0.0, %v521
    %v523 = vpop.f32.mrb[0].mxu0
    %v524 = vpop.f32.mrb[0].mxu0
    %v525 = vadd.f32 0.0, %v524
    %v526 = vpop.f32.mrb[0].mxu0
    %527 = vmatprep.mubr.bf16.mxu0 0
    %528 = vmatmul.mubr.bf16.gmra.mrb[0].mxu0 %v296
    %v529 = vpop.f32.mrb[0].mxu0
    %v530 = vadd.f32 0.0, %v529
    %v531 = vpop.f32.mrb[0].mxu0
    %v532 = vpop.f32.mrb[0].mxu0
    %v533 = vadd.f32 0.0, %v532
    %v534 = vpop.f32.mrb[0].mxu0
    %535 = vdwg.mxu0
    %v536 = vadd.f32 %v66, %v199
    %v537 = vadd.f32 %v67, %v202
    %v538 = vadd.f32 %v68, %v207
    %v539 = vadd.f32 %v69, %v210
    %v540 = vadd.f32 %v70, %v215
    %v541 = vadd.f32 %v71, %v218
    %v542 = vadd.f32 %v536, %v446
    %v543 = vadd.f32 %v537, %v449
    %v544 = vadd.f32 %v538, %v454
    %v545 = vadd.f32 %v539, %v457
    %v546 = vadd.f32 %v540, %v462
    %v547 = vadd.f32 %v541, %v465
    %v548 = vmul.f32 %v542, 0.25
    %v549 = vmul.f32 %v543, 0.25
    %v550 = vmul.f32 %v544, 0.25
    %v551 = vmul.f32 %v545, 0.25
    %v552 = vmul.f32 %v546, 0.25
    %v553 = vmul.f32 %v547, 0.25
    %v554 = vld [vmem:[%s7] sm:$0xff]
    %v555 = vld [vmem:[%s7 + $0x8] sm:$0xff]
    %v556 = vld [vmem:[%s7 + $0x10] sm:$0xff]
    %v557 = vld [vmem:[%s7 + $0x18] sm:$0xff]
    %v558 = vld [vmem:[%s7 + $0x20] sm:$0xff]
    %v559 = vld [vmem:[%s7 + $0x28] sm:$0xff]
    %561 = vset.pattern.permute.xlu0 0
    %562 = vperm.xlu0 %561, %v554
    %v563 = vpop.permute.xlu0 %562
    %566 = vset.pattern.permute.xlu0 0
    %567 = vperm.xlu0 %566, %v555
    %v568 = vpop.permute.xlu0 %567
    %571 = vset.pattern.permute.xlu0 0
    %572 = vperm.xlu0 %571, %v556
    %v573 = vpop.permute.xlu0 %572
    %576 = vset.pattern.permute.xlu0 0
    %577 = vperm.xlu0 %576, %v557
    %v578 = vpop.permute.xlu0 %577
    %581 = vset.pattern.permute.xlu0 0
    %582 = vperm.xlu0 %581, %v558
    %v583 = vpop.permute.xlu0 %582
    %586 = vset.pattern.permute.xlu0 0
    %587 = vperm.xlu0 %586, %v559
    %v588 = vpop.permute.xlu0 %587
    %v590 = vmul.f32 %v223, %v563
    %v591 = vmul.f32 %v226, %v568
    %v592 = vmul.f32 %v231, %v573
    %v593 = vmul.f32 %v234, %v578
    %v594 = vmul.f32 %v239, %v583
    %v595 = vmul.f32 %v242, %v588
    %v596 = vadd.f32 %v548, %v590
    %v597 = vadd.f32 %v549, %v591
    %v598 = vadd.f32 %v550, %v592
    %v599 = vadd.f32 %v551, %v593
    %v600 = vadd.f32 %v552, %v594
    %v601 = vadd.f32 %v553, %v595
    %vm602 = vcmask 261120
    %603 = vst.msk [vmem:[#allocation2] sm:$0xff] %vm602, %v596
    %604 = vst.msk [vmem:[#allocation2 + $0x8] sm:$0xff] %vm602, %v597
    %605 = vst.msk [vmem:[#allocation2 + $0x10] sm:$0xff] %vm602, %v598
    %606 = vst.msk [vmem:[#allocation2 + $0x18] sm:$0xff] %vm602, %v599
    %607 = vst.msk [vmem:[#allocation2 + $0x20] sm:$0xff] %vm602, %v600
    %608 = vst.msk [vmem:[#allocation2 + $0x28] sm:$0xff] %vm602, %v601
    %v609 = vadd.f32 %v72, %v345
    %v610 = vadd.f32 %v73, %v348
    %v611 = vadd.f32 %v74, %v353
    %v612 = vadd.f32 %v75, %v356
    %v613 = vadd.f32 %v76, %v361
    %v614 = vadd.f32 %v77, %v364
    %v615 = vadd.f32 %v78, %v369
    %v616 = vadd.f32 %v79, %v372
    %v617 = vadd.f32 %v609, %v506
    %v618 = vadd.f32 %v610, %v509
    %v619 = vadd.f32 %v611, %v514
    %v620 = vadd.f32 %v612, %v517
    %v621 = vadd.f32 %v613, %v522
    %v622 = vadd.f32 %v614, %v525
    %v623 = vadd.f32 %v615, %v530
    %v624 = vadd.f32 %v616, %v533
    %v625 = vadd.f32 %v617, %v377
    %v626 = vadd.f32 %v618, %v380
    %v627 = vadd.f32 %v619, %v385
    %v628 = vadd.f32 %v620, %v388
    %v629 = vadd.f32 %v621, %v393
    %v630 = vadd.f32 %v622, %v396
    %v631 = vadd.f32 %v623, %v401
    %v632 = vadd.f32 %v624, %v404
    %v633 = vmul.f32 %v625, 0.25
    %v634 = vmul.f32 %v626, 0.25
    %v635 = vmul.f32 %v627, 0.25
    %v636 = vmul.f32 %v628, 0.25
    %v637 = vmul.f32 %v629, 0.25
    %v638 = vmul.f32 %v630, 0.25
    %v639 = vmul.f32 %v631, 0.25
    %v640 = vmul.f32 %v632, 0.25
    %641 = vst.msk [vmem:[#allocation3] sm:$0xff] %vm602, %v633
    %642 = vst.msk [vmem:[#allocation3 + $0x8] sm:$0xff] %vm602, %v634
    %643 = vst.msk [vmem:[#allocation3 + $0x10] sm:$0xff] %vm602, %v635
    %644 = vst.msk [vmem:[#allocation3 + $0x18] sm:$0xff] %vm602, %v636
    %645 = vst.msk [vmem:[#allocation3 + $0x20] sm:$0xff] %vm602, %v637
    %646 = vst.msk [vmem:[#allocation3 + $0x28] sm:$0xff] %vm602, %v638
    %647 = vst.msk [vmem:[#allocation3 + $0x30] sm:$0xff] %vm602, %v639
    %648 = vst.msk [vmem:[#allocation3 + $0x38] sm:$0xff] %vm602, %v640
    %s649 = sld [smem:[#allocation5]]
    %s650 = scalar_lea.vmem [#allocation2], %s649
    %v651 = vld [vmem:[%s650] sm:$0x1]
    %vm652 = vcmask 253952
    %653 = vst.msk [vmem:[#allocation4] sm:$0x1] %vm652, %v651
    %s654 = sld [smem:[#allocation7]]
    %s655 = scalar_lea.vmem [#allocation3], %s654
    %v656 = vld [vmem:[%s655] sm:$0x1]
    %657 = vst.msk [vmem:[#allocation4 + $0x8] sm:$0x1] %vm652, %v656
    %s658 = sld [smem:[#allocation9]]
    %s659 = scalar_lea.vmem [#allocation3], %s658
    %v660 = vld [vmem:[%s659] sm:$0x1]
    %661 = vst.msk [vmem:[#allocation4 + $0x10] sm:$0x1] %vm652, %v660
    %s662 = sld [smem:[#allocation5 + $0x1]]
    %s663 = scalar_lea.vmem [#allocation2], %s662
    %v664 = vld [vmem:[%s663] sm:$0x1]
    %665 = vst.msk [vmem:[#allocation4 + $0x1] sm:$0x1] %vm652, %v664
    %s666 = sld [smem:[#allocation7 + $0x1]]
    %s667 = scalar_lea.vmem [#allocation3], %s666
    %v668 = vld [vmem:[%s667] sm:$0x1]
    %669 = vst.msk [vmem:[#allocation4 + $0x9] sm:$0x1] %vm652, %v668
    %s670 = sld [smem:[#allocation9 + $0x1]]
    %s671 = scalar_lea.vmem [#allocation3], %s670
    %v672 = vld [vmem:[%s671] sm:$0x1]
    %673 = vst.msk [vmem:[#allocation4 + $0x11] sm:$0x1] %vm652, %v672
    %s674 = sld [smem:[#allocation5 + $0x2]]
    %s675 = scalar_lea.vmem [#allocation2], %s674
    %v676 = vld [vmem:[%s675] sm:$0x1]
    %677 = vst.msk [vmem:[#allocation4 + $0x2] sm:$0x1] %vm652, %v676
    %s678 = sld [smem:[#allocation7 + $0x2]]
    %s679 = scalar_lea.vmem [#allocation3], %s678
    %v680 = vld [vmem:[%s679] sm:$0x1]
    %681 = vst.msk [vmem:[#allocation4 + $0xa] sm:$0x1] %vm652, %v680
    %s682 = sld [smem:[#allocation9 + $0x2]]
    %s683 = scalar_lea.vmem [#allocation3], %s682
    %v684 = vld [vmem:[%s683] sm:$0x1]
    %685 = vst.msk [vmem:[#allocation4 + $0x12] sm:$0x1] %vm652, %v684
    %s686 = sld [smem:[#allocation5 + $0x3]]
    %s687 = scalar_lea.vmem [#allocation2], %s686
    %v688 = vld [vmem:[%s687] sm:$0x1]
    %689 = vst.msk [vmem:[#allocation4 + $0x3] sm:$0x1] %vm652, %v688
    %s690 = sld [smem:[#allocation7 + $0x3]]
    %s691 = scalar_lea.vmem [#allocation3], %s690
    %v692 = vld [vmem:[%s691] sm:$0x1]
    %693 = vst.msk [vmem:[#allocation4 + $0xb] sm:$0x1] %vm652, %v692
    %s694 = sld [smem:[#allocation9 + $0x3]]
    %s695 = scalar_lea.vmem [#allocation3], %s694
    %v696 = vld [vmem:[%s695] sm:$0x1]
    %697 = vst.msk [vmem:[#allocation4 + $0x13] sm:$0x1] %vm652, %v696
    %s698 = sld [smem:[#allocation5 + $0x4]]
    %s699 = scalar_lea.vmem [#allocation2], %s698
    %v700 = vld [vmem:[%s699] sm:$0x1]
    %701 = vst.msk [vmem:[#allocation4 + $0x4] sm:$0x1] %vm652, %v700
    %s702 = sld [smem:[#allocation7 + $0x4]]
    %s703 = scalar_lea.vmem [#allocation3], %s702
    %v704 = vld [vmem:[%s703] sm:$0x1]
    %705 = vst.msk [vmem:[#allocation4 + $0xc] sm:$0x1] %vm652, %v704
    %s706 = sld [smem:[#allocation9 + $0x4]]
    %s707 = scalar_lea.vmem [#allocation3], %s706
    %v708 = vld [vmem:[%s707] sm:$0x1]
    %709 = vst.msk [vmem:[#allocation4 + $0x14] sm:$0x1] %vm652, %v708
    %s710 = sld [smem:[#allocation5 + $0x5]]
    %s711 = scalar_lea.vmem [#allocation2], %s710
    %v712 = vld [vmem:[%s711] sm:$0x1]
    %713 = vst.msk [vmem:[#allocation4 + $0x5] sm:$0x1] %vm652, %v712
    %s714 = sld [smem:[#allocation7 + $0x5]]
    %s715 = scalar_lea.vmem [#allocation3], %s714
    %v716 = vld [vmem:[%s715] sm:$0x1]
    %717 = vst.msk [vmem:[#allocation4 + $0xd] sm:$0x1] %vm652, %v716
    %s718 = sld [smem:[#allocation9 + $0x5]]
    %s719 = scalar_lea.vmem [#allocation3], %s718
    %v720 = vld [vmem:[%s719] sm:$0x1]
    %721 = vst.msk [vmem:[#allocation4 + $0x15] sm:$0x1] %vm652, %v720
    %s722 = sld [smem:[#allocation5 + $0x6]]
    %s723 = scalar_lea.vmem [#allocation2], %s722
    %v724 = vld [vmem:[%s723] sm:$0x1]
    %725 = vst.msk [vmem:[#allocation4 + $0x6] sm:$0x1] %vm652, %v724
    %s726 = sld [smem:[#allocation7 + $0x6]]
    %s727 = scalar_lea.vmem [#allocation3], %s726
    %v728 = vld [vmem:[%s727] sm:$0x1]
    %729 = vst.msk [vmem:[#allocation4 + $0xe] sm:$0x1] %vm652, %v728
    %s730 = sld [smem:[#allocation9 + $0x6]]
    %s731 = scalar_lea.vmem [#allocation3], %s730
    %v732 = vld [vmem:[%s731] sm:$0x1]
    %733 = vst.msk [vmem:[#allocation4 + $0x16] sm:$0x1] %vm652, %v732
    %s734 = sld [smem:[#allocation5 + $0x7]]
    %s735 = scalar_lea.vmem [#allocation2], %s734
    %v736 = vld [vmem:[%s735] sm:$0x1]
    %737 = vst.msk [vmem:[#allocation4 + $0x7] sm:$0x1] %vm652, %v736
    %s738 = sld [smem:[#allocation7 + $0x7]]
    %s739 = scalar_lea.vmem [#allocation3], %s738
    %v740 = vld [vmem:[%s739] sm:$0x1]
    %741 = vst.msk [vmem:[#allocation4 + $0xf] sm:$0x1] %vm652, %v740
    %s742 = sld [smem:[#allocation9 + $0x7]]
    %s743 = scalar_lea.vmem [#allocation3], %s742
    %v744 = vld [vmem:[%s743] sm:$0x1]
    %745 = vst.msk [vmem:[#allocation4 + $0x17] sm:$0x1] %vm652, %v744
    %v746 = vld [vmem:[#allocation4] sm:$0xff]
    %v747 = vld [vmem:[#allocation4 + $0x8] sm:$0xff]
    %v748 = vld [vmem:[#allocation4 + $0x10] sm:$0xff]
    %v749 = vmul.f32 %v746, %v747
    %v750 = vsel %vm602, %v749, 0.0
    %751 = vadd.xlane.f32.xlu0 %v750
    %v752 = vpop.xlane.xlu0 %751
    %v753 = vmul.f32 %v746, %v748
    %v754 = vsel %vm602, %v753, 0.0
    %755 = vadd.xlane.f32.xlu0 %v754
    %v756 = vpop.xlane.xlu0 %755
    %v757 = vmul.f32 %v746, %v746
    %v758 = vmul.f32 %v747, %v747
    %v759 = vadd.f32 %v757, %v758
    %v760 = vmul.f32 %v748, %v748
    %v761 = vadd.f32 %v759, %v760
    %v762 = vsel %vm602, %v761, 0.0
    %763 = vadd.xlane.f32.xlu0 %v762
    %v764 = vpop.xlane.xlu0 %763
    %v765 = vmul.f32 %v764, 0.0001
    %v766 = vsub.f32 %v752, %v756
    %v767 = vmin.f32 %v766, 0.0
    %v768 = vand.u32 2147483647, %v766
    %v769 = vsub.f32 0.0, %v768
    %v770 = vmul.f32 %v769, 1.442695
    %v771 = vpow.pop %v770
    %v772 = vadd.f32 %v771, 1.0
    %v773 = vlog2.pop %v772
    %v774 = vmul.f32 %v773, 0.6931472
    %v775 = vsub.f32 %v767, %v774
    %vm776 = vcmask 7168
    %v777 = vsel %vm776, %v775, 0.0
    %778 = vadd.xlane.f32.xlu0 %v777
    %v779 = vpop.xlane.xlu0 %778
    %v780 = vrot.slane %v779, 4
    %v781 = vadd.f32 %v779, %v780
    %v782 = vrot.slane %v781, 2
    %v783 = vadd.f32 %v781, %v782
    %v784 = vrot.slane %v783, 1
    %v785 = vadd.f32 %v783, %v784
    %s786 = vtos %v785
    %s787 = ssub.f32 0.0, %s786
    %s788 = smul.f32 %s787, 0.125
    %v789 = vsel %vm776, %v765, 0.0
    %790 = vadd.xlane.f32.xlu0 %v789
    %v791 = vpop.xlane.xlu0 %790
    %v792 = vrot.slane %v791, 4
    %v793 = vadd.f32 %v791, %v792
    %v794 = vrot.slane %v793, 2
    %v795 = vadd.f32 %v793, %v794
    %v796 = vrot.slane %v795, 1
    %v797 = vadd.f32 %v795, %v796
    %s798 = vtos %v797
    %s799 = smul.f32 %s798, 0.125
    %s800 = sadd.f32 %s788, %s799
    %v801 = vlaneseq
    %v802 = vand.u32 %v801, 127
    %vm803 = vcmp.eq.s32.totalorder %v802, 0
    %v804 = vsel %vm803, %v752, 0.0
    %vm805 = vcmp.eq.s32.totalorder %v802, 1
    %v806 = vsel %vm805, %v756, %v804
    %vm807 = vcmp.eq.s32.totalorder %v802, 2
    %v808 = vstv %s800
    %v809 = vsel %vm807, %v808, %v806
    %vm810 = vcmp.eq.s32.totalorder %v802, 3
    %v811 = vstv %s788
    %v812 = vsel %vm810, %v811, %v809
    %813 = vst [vmem:[%s8] sm:$0xff] %v812
    // Predicated region
    $region46: #{bpr_forward.1} parent=1 // pred_check
      _
    $region47: #{bpr_forward.1} parent=1 // pred_check_branch
      %815 = sbr.rel (0) target = $region49
    $region48: #{bpr_forward.1} parent=1 // pred_region
      _
    $region49: #{bpr_forward.1} parent=1 // pred_fallthru
      _
    // Predicated region
    $region50: #{bpr_forward.1} parent=1 // pred_check
      _
    $region51: #{bpr_forward.1} parent=1 // pred_check_branch
      %817 = sbr.rel (0) target = $region53
    $region52: #{bpr_forward.1} parent=1 // pred_region
      _
    $region53: #{bpr_forward.1} parent=1 // pred_fallthru
      _
    %818 = vsyncpa [#allocation6], 1
    %819 = vsyncpa [#allocation8], 1

</llo_original>
